<compile_context>
chip_gen: v7x
topology: tpu7x:2x2x1
jax: 0.10.0
libtpu: 0.0.40
codegen_flags: <defaults>
</compile_context>

<pallas_src>
import jax
import jax.numpy as jnp
from jax.experimental import pallas as pl
from jax.experimental.pallas import tpu as pltpu


def _attention_kernel(xd_ref, xl_ref, Wd_ref, Wl_ref, b_ref, out_ref):
    """One grid step: a (TB, Dd)+(TB, Dl) row-tile of the batch.

    Wd_ref: (Dd, P+1)  columns [dom_proj | s_d],   query folded into last col.
    Wl_ref: (Dl, P+1)  columns [lead_proj | s_l].
    b_ref : (2,  P+1)  row 0 = [b_d | b_d.q], row 1 = [b_l | b_l.q].
    out   : (TB, P+2)  columns [attended | w_d | w_l].
    """
    P = out_ref.shape[-1] - 2

    proj_d = jnp.dot(xd_ref[...], Wd_ref[...],
                     preferred_element_type=jnp.float32) + b_ref[0:1, :]
    proj_l = jnp.dot(xl_ref[...], Wl_ref[...],
                     preferred_element_type=jnp.float32) + b_ref[1:2, :]

    dom_p = proj_d[:, :P]
    lead_p = proj_l[:, :P]
    s_d = proj_d[:, P:P + 1]
    s_l = proj_l[:, P:P + 1]

    # 2-way softmax over {domain, lead}: sigmoid of the score difference
    # (exactly softmax for two logits). Single EUP op, no divide.
    w_d = jax.nn.sigmoid(s_d - s_l)
    w_l = 1.0 - w_d

    out_ref[:, :P] = (w_d * dom_p + w_l * lead_p).astype(out_ref.dtype)
    out_ref[:, P:P + 1] = w_d.astype(out_ref.dtype)
    out_ref[:, P + 1:P + 2] = w_l.astype(out_ref.dtype)


def pack_params(params):
    """Hoisted out of the forward path: fold query into the projection weights.

    params: W_d (Dd,P), b_d (P,), W_l (Dl,P), b_l (P,), query (P,).
    Returns the extended weights used by the kernel. Call once at init.
    """
    W_d = params["W_d"].astype(jnp.float32)
    W_l = params["W_l"].astype(jnp.float32)
    b_d = params["b_d"].astype(jnp.float32)
    b_l = params["b_l"].astype(jnp.float32)
    q = params["query"].astype(jnp.float32)

    W_d_ext = jnp.concatenate([W_d, (W_d @ q)[:, None]], axis=1)  # (Dd, P+1)
    W_l_ext = jnp.concatenate([W_l, (W_l @ q)[:, None]], axis=1)  # (Dl, P+1)
    b_pair = jnp.stack([
        jnp.concatenate([b_d, (b_d @ q)[None]]),
        jnp.concatenate([b_l, (b_l @ q)[None]]),
    ], axis=0)                                                    # (2, P+1)
    return {"W_d_ext": W_d_ext, "W_l_ext": W_l_ext, "b_pair": b_pair}


def domain_lead_site_attention(domain_features, lead_site_features, packed,
                               *, block_b=2048):
    """Fused forward. `packed` comes from pack_params(params)."""
    B, Dd = domain_features.shape
    Dl = lead_site_features.shape[1]
    W_d_ext = packed["W_d_ext"]
    W_l_ext = packed["W_l_ext"]
    b_pair = packed["b_pair"]
    Pp1 = W_d_ext.shape[1]
    P = Pp1 - 1
    N_out = P + 2

    # Batch tiling: single block for small B; 2048-row tiles otherwise
    # (any B > block_b gives grid >= 2, so v7x's two TCs both get steps).
    TB = B if B <= block_b else block_b
    grid = (pl.cdiv(B, TB),)

    cost = pl.CostEstimate(
        flops=2 * B * (Dd + Dl) * Pp1 + 6 * B * P,
        transcendentals=B,
        bytes_accessed=4 * (B * (Dd + Dl) + (Dd + Dl) * Pp1 + 2 * Pp1
                            + B * N_out),
    )

    out = pl.pallas_call(
        _attention_kernel,
        out_shape=jax.ShapeDtypeStruct((B, N_out), jnp.float32),
        grid=grid,
        in_specs=[
            pl.BlockSpec((TB, Dd), lambda i: (i, 0)),    # domain activations
            pl.BlockSpec((TB, Dl), lambda i: (i, 0)),    # lead_site activations
            pl.BlockSpec((Dd, Pp1), lambda i: (0, 0)),   # W_d_ext (VMEM resident)
            pl.BlockSpec((Dl, Pp1), lambda i: (0, 0)),   # W_l_ext (VMEM resident)
            pl.BlockSpec((2, Pp1), lambda i: (0, 0)),    # bias pair (resident)
        ],
        out_specs=pl.BlockSpec((TB, N_out), lambda i: (i, 0)),
        compiler_params=pltpu.CompilerParams(
            dimension_semantics=("parallel",),
            vmem_limit_bytes=32 * 1024 * 1024),
        cost_estimate=cost,
    )(domain_features.astype(jnp.float32),
      lead_site_features.astype(jnp.float32),
      W_d_ext, W_l_ext, b_pair)

    attended = out[:, :P]
    attn_weights = out[:, P:]   # [w_domain, w_lead]
    return attended, attn_weights


def init_params(key, domain_dim, lead_site_dim, proj_dim=24):
    """Deterministic synthetic init mirroring nn.Linear / nn.Parameter shapes."""
    k1, k2, k3, k4, k5 = jax.random.split(key, 5)
    # nn.Linear stores weight as (out, in); pre-transpose to (in, out).
    w_d = jax.random.normal(k1, (proj_dim, domain_dim), jnp.float32) * 0.1
    b_d = jax.random.normal(k2, (proj_dim,), jnp.float32) * 0.1
    w_l = jax.random.normal(k3, (proj_dim, lead_site_dim), jnp.float32) * 0.1
    b_l = jax.random.normal(k4, (proj_dim,), jnp.float32) * 0.1
    query = jax.random.normal(k5, (proj_dim,), jnp.float32)
    return {
        "W_d": w_d.T,          # (domain_dim, proj_dim)
        "b_d": b_d,
        "W_l": w_l.T,          # (lead_site_dim, proj_dim)
        "b_l": b_l,
        "query": query,
    }


def _reference(domain_features, lead_site_features, params):
    dom_p = domain_features @ params["W_d"] + params["b_d"]
    lead_p = lead_site_features @ params["W_l"] + params["b_l"]
    combined = jnp.stack([dom_p, lead_p], axis=1)           # (B, 2, P)
    scores = jnp.einsum("bkp,p->bk", combined, params["query"])
    weights = jax.nn.softmax(scores, axis=1)
    attended = jnp.sum(combined * weights[..., None], axis=1)
    return attended, weights


if __name__ == "__main__":
    key = jax.random.PRNGKey(0)
    k_params, k_dom, k_lead = jax.random.split(key, 3)

    batch = 8
    domain_dim = 16
    lead_site_dim = 32
    proj_dim = 24

    params = init_params(k_params, domain_dim, lead_site_dim, proj_dim)
    packed = pack_params(params)   # hoisted: done once, not per forward call

    domain_features = jax.random.normal(k_dom, (batch, domain_dim), jnp.float32)
    lead_site_features = jax.random.normal(k_lead, (batch, lead_site_dim),
                                           jnp.float32)

    attended, attn_weights = domain_lead_site_attention(
        domain_features, lead_site_features, packed)
    jax.block_until_ready((attended, attn_weights))

    ref_attended, ref_weights = _reference(domain_features, lead_site_features,
                                           params)
    assert attended.shape == (batch, proj_dim)
    assert attn_weights.shape == (batch, 2)
    assert jnp.allclose(attended, ref_attended, atol=1e-5, rtol=1e-5)
    assert jnp.allclose(attn_weights, ref_weights, atol=1e-5, rtol=1e-5)

    print("KERNEL_OK")
</pallas_src>

<mosaic_0001>
module attributes {stable_mosaic.version = 11 : i64} {
  func.func @_attention_kernel(%arg0: i32, %arg1: memref<8x16xf32, #tpu.memory_space<vmem>>, %arg2: memref<8x32xf32, #tpu.memory_space<vmem>>, %arg3: memref<16x25xf32, #tpu.memory_space<vmem>>, %arg4: memref<32x25xf32, #tpu.memory_space<vmem>>, %arg5: memref<2x25xf32, #tpu.memory_space<vmem>>, %arg6: memref<8x26xf32, #tpu.memory_space<vmem>>) attributes {dimension_semantics = [#tpu.dimension_semantics<parallel>], iteration_bounds = array<i64: 1>, scalar_prefetch = 0 : i64, scratch_operands = 0 : i64, tpu.core_type = #tpu.core_type<tc>, window_params = [{transform_indices = @transform_0, window_bounds = array<i64: 8, 16>}, {transform_indices = @transform_1, window_bounds = array<i64: 8, 32>}, {pipeline_mode = #tpu.pipeline_mode<synchronous>, transform_indices = @transform_2, window_bounds = array<i64: 16, 25>}, {pipeline_mode = #tpu.pipeline_mode<synchronous>, transform_indices = @transform_3, window_bounds = array<i64: 32, 25>}, {pipeline_mode = #tpu.pipeline_mode<synchronous>, transform_indices = @transform_4, window_bounds = array<i64: 2, 25>}, {transform_indices = @transform_5, window_bounds = array<i64: 8, 26>}]} {
    %c0 = arith.constant 0 : index
    %c0_0 = arith.constant 0 : index
    %0 = vector.load %arg1[%c0, %c0_0] : memref<8x16xf32, #tpu.memory_space<vmem>>, vector<8x16xf32>
    %c0_1 = arith.constant 0 : index
    %c0_2 = arith.constant 0 : index
    %1 = vector.load %arg3[%c0_1, %c0_2] : memref<16x25xf32, #tpu.memory_space<vmem>>, vector<16x25xf32>
    %cst = arith.constant dense<0.000000e+00> : vector<8x25xf32>
    %2 = tpu.matmul %0, %1, %cst {dimension_numbers = #tpu.dot_dimension_numbers<[1], [0], [0], [1], [0, 0, 1, 1], [], []>} : vector<8x16xf32>, vector<16x25xf32>, vector<8x25xf32> -> vector<8x25xf32>
    %c0_3 = arith.constant 0 : index
    %c0_4 = arith.constant 0 : index
    %3 = vector.load %arg5[%c0_3, %c0_4] : memref<2x25xf32, #tpu.memory_space<vmem>>, vector<1x25xf32>
    %4 = vector.broadcast %3 : vector<1x25xf32> to vector<8x25xf32>
    %5 = arith.addf %2, %4 : vector<8x25xf32>
    %c0_5 = arith.constant 0 : index
    %c0_6 = arith.constant 0 : index
    %6 = vector.load %arg2[%c0_5, %c0_6] : memref<8x32xf32, #tpu.memory_space<vmem>>, vector<8x32xf32>
    %c0_7 = arith.constant 0 : index
    %c0_8 = arith.constant 0 : index
    %7 = vector.load %arg4[%c0_7, %c0_8] : memref<32x25xf32, #tpu.memory_space<vmem>>, vector<32x25xf32>
    %cst_9 = arith.constant dense<0.000000e+00> : vector<8x25xf32>
    %8 = tpu.matmul %6, %7, %cst_9 {dimension_numbers = #tpu.dot_dimension_numbers<[1], [0], [0], [1], [0, 0, 1, 1], [], []>} : vector<8x32xf32>, vector<32x25xf32>, vector<8x25xf32> -> vector<8x25xf32>
    %c1 = arith.constant 1 : index
    %c0_10 = arith.constant 0 : index
    %9 = vector.load %arg5[%c1, %c0_10] : memref<2x25xf32, #tpu.memory_space<vmem>>, vector<1x25xf32>
    %10 = vector.broadcast %9 : vector<1x25xf32> to vector<8x25xf32>
    %11 = arith.addf %8, %10 : vector<8x25xf32>
    %12 = vector.extract_strided_slice %5 {offsets = [0, 0], sizes = [8, 24], strides = [1, 1]} : vector<8x25xf32> to vector<8x24xf32>
    %13 = vector.extract_strided_slice %11 {offsets = [0, 0], sizes = [8, 24], strides = [1, 1]} : vector<8x25xf32> to vector<8x24xf32>
    %14 = vector.extract_strided_slice %5 {offsets = [0, 24], sizes = [8, 1], strides = [1, 1]} : vector<8x25xf32> to vector<8x1xf32>
    %15 = vector.extract_strided_slice %11 {offsets = [0, 24], sizes = [8, 1], strides = [1, 1]} : vector<8x25xf32> to vector<8x1xf32>
    %16 = arith.subf %14, %15 : vector<8x1xf32>
    %17 = arith.negf %16 : vector<8x1xf32>
    %18 = math.exp %17 : vector<8x1xf32>
    %cst_11 = arith.constant 1.000000e+00 : f32
    %19 = vector.broadcast %cst_11 : f32 to vector<8x1xf32>
    %20 = arith.addf %19, %18 : vector<8x1xf32>
    %21 = arith.divf %19, %20 : vector<8x1xf32>
    %cst_12 = arith.constant 1.000000e+00 : f32
    %22 = vector.broadcast %cst_12 : f32 to vector<8x1xf32>
    %23 = arith.subf %22, %21 : vector<8x1xf32>
    %24 = vector.broadcast %21 : vector<8x1xf32> to vector<8x24xf32>
    %25 = arith.mulf %24, %12 : vector<8x24xf32>
    %26 = vector.broadcast %23 : vector<8x1xf32> to vector<8x24xf32>
    %27 = arith.mulf %26, %13 : vector<8x24xf32>
    %28 = arith.addf %25, %27 : vector<8x24xf32>
    %c0_13 = arith.constant 0 : index
    %c0_14 = arith.constant 0 : index
    %29 = vector.load %arg6[%c0_13, %c0_14] : memref<8x26xf32, #tpu.memory_space<vmem>>, vector<8x24xf32>
    tpu.vector_store %arg6[%c0_13, %c0_14], %28 {strides = array<i32>} : memref<8x26xf32, #tpu.memory_space<vmem>>, vector<8x24xf32>,
    %c0_15 = arith.constant 0 : index
    %c24 = arith.constant 24 : index
    %30 = vector.load %arg6[%c0_15, %c24] : memref<8x26xf32, #tpu.memory_space<vmem>>, vector<8x1xf32>
    tpu.vector_store %arg6[%c0_15, %c24], %21 {strides = array<i32>} : memref<8x26xf32, #tpu.memory_space<vmem>>, vector<8x1xf32>,
    %c0_16 = arith.constant 0 : index
    %c25 = arith.constant 25 : index
    %31 = vector.load %arg6[%c0_16, %c25] : memref<8x26xf32, #tpu.memory_space<vmem>>, vector<8x1xf32>
    tpu.vector_store %arg6[%c0_16, %c25], %23 {strides = array<i32>} : memref<8x26xf32, #tpu.memory_space<vmem>>, vector<8x1xf32>,
    return
  }
  func.func @transform_0(%arg0: i32) -> (i32, i32) {
    %c0_i32 = arith.constant 0 : i32
    %c0_i32_0 = arith.constant 0 : i32
    return %arg0, %c0_i32 : i32, i32
  }
  func.func @transform_1(%arg0: i32) -> (i32, i32) {
    %c0_i32 = arith.constant 0 : i32
    %c0_i32_0 = arith.constant 0 : i32
    return %arg0, %c0_i32 : i32, i32
  }
  func.func @transform_2(%arg0: i32) -> (i32, i32) {
    %c0_i32 = arith.constant 0 : i32
    %c0_i32_0 = arith.constant 0 : i32
    %c0_i32_1 = arith.constant 0 : i32
    return %c0_i32, %c0_i32_0 : i32, i32
  }
  func.func @transform_3(%arg0: i32) -> (i32, i32) {
    %c0_i32 = arith.constant 0 : i32
    %c0_i32_0 = arith.constant 0 : i32
    %c0_i32_1 = arith.constant 0 : i32
    return %c0_i32, %c0_i32_0 : i32, i32
  }
  func.func @transform_4(%arg0: i32) -> (i32, i32) {
    %c0_i32 = arith.constant 0 : i32
    %c0_i32_0 = arith.constant 0 : i32
    %c0_i32_1 = arith.constant 0 : i32
    return %c0_i32, %c0_i32_0 : i32, i32
  }
  func.func @transform_5(%arg0: i32) -> (i32, i32) {
    %c0_i32 = arith.constant 0 : i32
    %c0_i32_0 = arith.constant 0 : i32
    return %arg0, %c0_i32 : i32, i32
  }
}

</mosaic_0001>

<llo_original>
// kernel: tpu_custom_call.1
$region0: #{tpu_custom_call.1}
  #allocation0 [shape = 'u32[]', space=smem, size = 0x4, offset = 0x4, fixed_abs, tag = 'smem constant byte address 0x4 - core index']
  #allocation1 [shape = 'u32[144,128]{1,0:T(1,128)}', space=vmem, size = 0x12000, scoped, tag = 'internal scratch']
  %s0 = inlined_call_operand.hbm [shape: f32[8,16], index: 0, kind: input, shape index: {}]
  %s1 = inlined_call_operand.hbm [shape: f32[8,32], index: 1, kind: input, shape index: {}]
  %s2 = inlined_call_operand.hbm [shape: f32[16,25], index: 2, kind: input, shape index: {}]
  %s3 = inlined_call_operand.hbm [shape: f32[32,25], index: 3, kind: input, shape index: {}]
  %s4 = inlined_call_operand.vmem [shape: f32[2,25], index: 4, kind: input, shape index: {}]
  %s5 = inlined_call_operand.hbm [shape: f32[8,26], index: 5, kind: output, shape index: {}]
  %s6 = sld [smem:[#allocation0]]
  $region46: #{tpu_custom_call.1} parent=0
    _
  %s8 = ssub.s32 1, %s6
  %s9 = scalar_select 0, %s8, %s6
  $region1: #{tpu_custom_call.1} parent=0
    #allocation2 [shape = 'u8[4096]{0}', space=vmem, size = 0x1000, scoped, tag = 'input window, operand 0, single buffered']
    #allocation3 [shape = 's32[1]{0}', space=sflag, size = 0x4, scoped, tag = 'scoped memory for tpu_custom_call.1']
    #allocation4 [shape = 's32[1]{0}', space=sflag, size = 0x4, scoped, tag = 'scoped memory for tpu_custom_call.1']
    #allocation5 [shape = 'u8[4096]{0}', space=vmem, size = 0x1000, scoped, tag = 'input window, operand 1, single buffered']
    #allocation6 [shape = 's32[1]{0}', space=sflag, size = 0x4, scoped, tag = 'scoped memory for tpu_custom_call.1']
    #allocation7 [shape = 'u8[8192]{0}', space=vmem, size = 0x2000, scoped, tag = 'input window, operand 2, single buffered']
    #allocation8 [shape = 'u8[16384]{0}', space=vmem, size = 0x4000, scoped, tag = 'input window, operand 3, single buffered']
    #allocation9 [shape = 's32[1]{0}', space=sflag, size = 0x4, scoped, tag = 'scoped memory for tpu_custom_call.1']
    #allocation10 [shape = 'u8[4096]{0}', space=vmem, size = 0x1000, scoped, tag = 'output window, operand 0, single buffered']
    %10 = vsyncpa [#allocation3], 0
    %11 = vsyncpa [#allocation6], 0
    %12 = vsyncpa [#allocation9], 0
    %13 = vsyncpa [#allocation4], 0
    // Predicated region
    $region2: #{tpu_custom_call.1} parent=1 // pred_check
      _
    $region3: #{tpu_custom_call.1} parent=1 // pred_check_branch
      %15 = sbr.rel (0) target = $region5
    $region4: #{tpu_custom_call.1} parent=1 // pred_region
      %s17 = ssub.s32 128, 128
      %18 = vsyncadd [#allocation3], %s17
      %s20 = sshll.u32 [#allocation2], 4
      %s21 = int_to_ptr.vmem [resolvable:$true] %s20
      %23 = dma.hbm_to_vmem [thread:$0]  %s0, 128, %s21, [#allocation3]
    $region5: #{tpu_custom_call.1} parent=1 // pred_fallthru
      _
    // Predicated region
    $region6: #{tpu_custom_call.1} parent=1 // pred_check
      _
    $region7: #{tpu_custom_call.1} parent=1 // pred_check_branch
      %25 = sbr.rel (0) target = $region9
    $region8: #{tpu_custom_call.1} parent=1 // pred_region
      %s27 = ssub.s32 128, 128
      %28 = vsyncadd [#allocation6], %s27
      %s30 = sshll.u32 [#allocation5], 4
      %s31 = int_to_ptr.vmem [resolvable:$true] %s30
      %33 = dma.hbm_to_vmem [thread:$0]  %s1, 128, %s31, [#allocation6]
    $region9: #{tpu_custom_call.1} parent=1 // pred_fallthru
      _
    // Predicated region
    $region10: #{tpu_custom_call.1} parent=1 // pred_check
      _
    $region11: #{tpu_custom_call.1} parent=1 // pred_check_branch
      %35 = sbr.rel (0) target = $region13
    $region12: #{tpu_custom_call.1} parent=1 // pred_region
      %s37 = ssub.s32 256, 256
      %38 = vsyncadd [#allocation6], %s37
      %s39 = sshll.u32 [#allocation7], 4
      %s40 = int_to_ptr.vmem [resolvable:$true] %s39
      %45 = dma.hbm_to_vmem [thread:$0]  %s2, 256, %s40, [#allocation6], 128, 128, 8
    $region13: #{tpu_custom_call.1} parent=1 // pred_fallthru
      _
    // Predicated region
    $region14: #{tpu_custom_call.1} parent=1 // pred_check
      _
    $region15: #{tpu_custom_call.1} parent=1 // pred_check_branch
      %47 = sbr.rel (0) target = $region17
    $region16: #{tpu_custom_call.1} parent=1 // pred_region
      %s49 = ssub.s32 512, 512
      %50 = vsyncadd [#allocation9], %s49
      %s51 = sshll.u32 [#allocation8], 4
      %s52 = int_to_ptr.vmem [resolvable:$true] %s51
      %57 = dma.hbm_to_vmem [thread:$0]  %s3, 512, %s52, [#allocation9], 128, 128, 8
    $region17: #{tpu_custom_call.1} parent=1 // pred_fallthru
      _
    // Predicated region
    $region18: #{tpu_custom_call.1} parent=1 // pred_check
      _
    $region19: #{tpu_custom_call.1} parent=1 // pred_check_branch
      %59 = sbr.rel (0) target = $region21
    $region20: #{tpu_custom_call.1} parent=1 // pred_region
      _
    $region21: #{tpu_custom_call.1} parent=1 // pred_fallthru
      _
    // Predicated region
    $region22: #{tpu_custom_call.1} parent=1 // pred_check
      _
    $region23: #{tpu_custom_call.1} parent=1 // pred_check_branch
      %61 = sbr.rel (0) target = $region25
    $region24: #{tpu_custom_call.1} parent=1 // pred_region
      %62 = dma.done [#allocation3], 128
    $region25: #{tpu_custom_call.1} parent=1 // pred_fallthru
      _
    // Predicated region
    $region26: #{tpu_custom_call.1} parent=1 // pred_check
      _
    $region27: #{tpu_custom_call.1} parent=1 // pred_check_branch
      %64 = sbr.rel (0) target = $region29
    $region28: #{tpu_custom_call.1} parent=1 // pred_region
      %65 = dma.done [#allocation6], 128
    $region29: #{tpu_custom_call.1} parent=1 // pred_fallthru
      _
    // Predicated region
    $region30: #{tpu_custom_call.1} parent=1 // pred_check
      _
    $region31: #{tpu_custom_call.1} parent=1 // pred_check_branch
      %67 = sbr.rel (0) target = $region33
    $region32: #{tpu_custom_call.1} parent=1 // pred_region
      %68 = dma.done [#allocation6], 256
    $region33: #{tpu_custom_call.1} parent=1 // pred_fallthru
      _
    // Predicated region
    $region34: #{tpu_custom_call.1} parent=1 // pred_check
      _
    $region35: #{tpu_custom_call.1} parent=1 // pred_check_branch
      %70 = sbr.rel (0) target = $region37
    $region36: #{tpu_custom_call.1} parent=1 // pred_region
      %71 = dma.done [#allocation9], 512
    $region37: #{tpu_custom_call.1} parent=1 // pred_fallthru
      _
    %v72 = vld [vmem:[#allocation2] sm:$0xff]
    %v73 = vld [vmem:[#allocation7] sm:$0xff]
    %v74 = vld [vmem:[#allocation7 + $0x8] sm:$0xff]
    %v75 = vld [vmem:[%s4] sm:$0x1]
    %v76 = vlaneseq
    %v77 = vshrl.u32 %v76, 7
    %v78 = vsub.s32 0, %v77
    %v79 = vrot.slane %v75, %v78
    %vm80 = vcmask 130048
    %v82 = vsel %vm80, %v72, 0
    %84 = vmatprep.subr.mxu0 0.0
    %85 = vmatpush1.msra.mxu0 %v73
    %86 = vmatprep.subr.mxu0 0.0
    %87 = vmatpush1.msra.mxu0 %v74
    %88 = vmatprep.subr.mxu0 0.0
    %89 = vmatpush1.msra.mxu0 0.0
    %90 = vmatprep.subr.mxu0 0.0
    %91 = vmatpush1.msra.mxu0 0.0
    %92 = vmatprep.subr.mxu0 0.0
    %93 = vmatpush1.msra.mxu0 0.0
    %94 = vmatprep.subr.mxu0 0.0
    %95 = vmatpush1.msra.mxu0 0.0
    %96 = vmatprep.subr.mxu0 0.0
    %97 = vmatpush1.msra.mxu0 0.0
    %98 = vmatprep.subr.mxu0 0.0
    %99 = vmatpush1.msra.mxu0 0.0
    %100 = vmatprep.subr.mxu0 0.0
    %101 = vmatpush1.msra.mxu0 0.0
    %102 = vmatprep.subr.mxu0 0.0
    %103 = vmatpush1.msra.mxu0 0.0
    %104 = vmatprep.subr.mxu0 0.0
    %105 = vmatpush1.msra.mxu0 0.0
    %106 = vmatprep.subr.mxu0 0.0
    %107 = vmatpush1.msra.mxu0 0.0
    %108 = vmatprep.subr.mxu0 0.0
    %109 = vmatpush1.msra.mxu0 0.0
    %110 = vmatprep.subr.mxu0 0.0
    %111 = vmatpush1.msra.mxu0 0.0
    %112 = vmatprep.subr.mxu0 0.0
    %113 = vmatpush1.msra.mxu0 0.0
    %114 = vmatprep.subr.mxu0 0.0
    %115 = vmatpush1.msra.mxu0 0.0
    %116 = vmatprep.subr.mxu0 0.0
    %117 = vmatpush1.msra.mxu0 0.0
    %118 = vmatprep.subr.mxu0 0.0
    %119 = vmatpush1.msra.mxu0 0.0
    %120 = vmatprep.subr.mxu0 0.0
    %121 = vmatpush1.msra.mxu0 0.0
    %122 = vmatprep.subr.mxu0 0.0
    %123 = vmatpush1.msra.mxu0 0.0
    %124 = vmatprep.subr.mxu0 0.0
    %125 = vmatpush1.msra.mxu0 0.0
    %126 = vmatprep.subr.mxu0 0.0
    %127 = vmatpush1.msra.mxu0 0.0
    %128 = vmatprep.subr.mxu0 0.0
    %129 = vmatpush1.msra.mxu0 0.0
    %130 = vmatprep.subr.mxu0 0.0
    %131 = vmatpush1.msra.mxu0 0.0
    %132 = vmatprep.subr.mxu0 0.0
    %133 = vmatpush1.msra.mxu0 0.0
    %134 = vmatprep.subr.mxu0 0.0
    %135 = vmatpush1.msra.mxu0 0.0
    %136 = vmatprep.subr.mxu0 0.0
    %137 = vmatpush1.msra.mxu0 0.0
    %138 = vmatprep.subr.mxu0 0.0
    %139 = vmatpush1.msra.mxu0 0.0
    %140 = vmatprep.subr.mxu0 0.0
    %141 = vmatpush1.msra.mxu0 0.0
    %142 = vmatprep.subr.mxu0 0.0
    %143 = vmatpush1.msra.mxu0 0.0
    %144 = vmatprep.subr.mxu0 0.0
    %145 = vmatpush1.msra.mxu0 0.0
    %146 = vmatprep.subr.mxu0 0.0
    %147 = vmatpush1.msra.mxu0 0.0
    %148 = vmatprep.mubr.f32.mxu0 0.0
    %149 = vmatmul.mubr.f32.gmra.mrb[0].mxu0 %v82
    %v150 = vpop.f32.mrb[0].mxu0
    %v151 = vadd.f32 %v79, %v150
    %v152 = vpop.f32.mrb[0].mxu0
    %153 = vdwg.mxu0
    %v154 = vld [vmem:[#allocation5] sm:$0xff]
    %v155 = vld [vmem:[#allocation8] sm:$0xff]
    %v156 = vld [vmem:[#allocation8 + $0x8] sm:$0xff]
    %v157 = vld [vmem:[#allocation8 + $0x10] sm:$0xff]
    %v158 = vld [vmem:[#allocation8 + $0x18] sm:$0xff]
    %v159 = vld [vmem:[%s4 + $0x1] sm:$0x1]
    %v160 = vlaneseq
    %v161 = vshrl.u32 %v160, 7
    %v162 = vsub.s32 0, %v161
    %v163 = vrot.slane %v159, %v162
    %vm164 = vcmask 261120
    %v166 = vsel %vm164, %v154, 0
    %168 = vmatprep.subr.mxu0 0.0
    %169 = vmatpush1.msra.mxu0 %v155
    %170 = vmatprep.subr.mxu0 0.0
    %171 = vmatpush1.msra.mxu0 %v156
    %172 = vmatprep.subr.mxu0 0.0
    %173 = vmatpush1.msra.mxu0 %v157
    %174 = vmatprep.subr.mxu0 0.0
    %175 = vmatpush1.msra.mxu0 %v158
    %176 = vmatprep.subr.mxu0 0.0
    %177 = vmatpush1.msra.mxu0 0.0
    %178 = vmatprep.subr.mxu0 0.0
    %179 = vmatpush1.msra.mxu0 0.0
    %180 = vmatprep.subr.mxu0 0.0
    %181 = vmatpush1.msra.mxu0 0.0
    %182 = vmatprep.subr.mxu0 0.0
    %183 = vmatpush1.msra.mxu0 0.0
    %184 = vmatprep.subr.mxu0 0.0
    %185 = vmatpush1.msra.mxu0 0.0
    %186 = vmatprep.subr.mxu0 0.0
    %187 = vmatpush1.msra.mxu0 0.0
    %188 = vmatprep.subr.mxu0 0.0
    %189 = vmatpush1.msra.mxu0 0.0
    %190 = vmatprep.subr.mxu0 0.0
    %191 = vmatpush1.msra.mxu0 0.0
    %192 = vmatprep.subr.mxu0 0.0
    %193 = vmatpush1.msra.mxu0 0.0
    %194 = vmatprep.subr.mxu0 0.0
    %195 = vmatpush1.msra.mxu0 0.0
    %196 = vmatprep.subr.mxu0 0.0
    %197 = vmatpush1.msra.mxu0 0.0
    %198 = vmatprep.subr.mxu0 0.0
    %199 = vmatpush1.msra.mxu0 0.0
    %200 = vmatprep.subr.mxu0 0.0
    %201 = vmatpush1.msra.mxu0 0.0
    %202 = vmatprep.subr.mxu0 0.0
    %203 = vmatpush1.msra.mxu0 0.0
    %204 = vmatprep.subr.mxu0 0.0
    %205 = vmatpush1.msra.mxu0 0.0
    %206 = vmatprep.subr.mxu0 0.0
    %207 = vmatpush1.msra.mxu0 0.0
    %208 = vmatprep.subr.mxu0 0.0
    %209 = vmatpush1.msra.mxu0 0.0
    %210 = vmatprep.subr.mxu0 0.0
    %211 = vmatpush1.msra.mxu0 0.0
    %212 = vmatprep.subr.mxu0 0.0
    %213 = vmatpush1.msra.mxu0 0.0
    %214 = vmatprep.subr.mxu0 0.0
    %215 = vmatpush1.msra.mxu0 0.0
    %216 = vmatprep.subr.mxu0 0.0
    %217 = vmatpush1.msra.mxu0 0.0
    %218 = vmatprep.subr.mxu0 0.0
    %219 = vmatpush1.msra.mxu0 0.0
    %220 = vmatprep.subr.mxu0 0.0
    %221 = vmatpush1.msra.mxu0 0.0
    %222 = vmatprep.subr.mxu0 0.0
    %223 = vmatpush1.msra.mxu0 0.0
    %224 = vmatprep.subr.mxu0 0.0
    %225 = vmatpush1.msra.mxu0 0.0
    %226 = vmatprep.subr.mxu0 0.0
    %227 = vmatpush1.msra.mxu0 0.0
    %228 = vmatprep.subr.mxu0 0.0
    %229 = vmatpush1.msra.mxu0 0.0
    %230 = vmatprep.subr.mxu0 0.0
    %231 = vmatpush1.msra.mxu0 0.0
    %232 = vmatprep.mubr.f32.mxu0 0.0
    %233 = vmatmul.mubr.f32.gmra.mrb[0].mxu0 %v166
    %v234 = vpop.f32.mrb[0].mxu0
    %v235 = vadd.f32 %v163, %v234
    %v236 = vpop.f32.mrb[0].mxu0
    %237 = vdwg.mxu0
    %v238 = vsub.f32 %v151, %v235
    %v239 = vxor.u32 %v238, 2147483648
    %v240 = vmul.f32 %v239, 1.442695
    %v241 = vpow.pop %v240
    %v242 = vadd.f32 %v241, 1.0
    %v243 = vrcp.pop %v242
    %v244 = vmul.f32 1.0, %v243
    %v245 = vsub.f32 1.0, %v244
    %247 = vset.pattern.permute.xlu0 24
    %248 = vperm.xlu0 %247, %v244
    %v249 = vpop.permute.xlu0 %248
    %v251 = vmul.f32 %v249, %v151
    %253 = vset.pattern.permute.xlu0 24
    %254 = vperm.xlu0 %253, %v245
    %v255 = vpop.permute.xlu0 %254
    %v257 = vmul.f32 %v255, %v235
    %v258 = vadd.f32 %v251, %v257
    %vm259 = vcmask 195584
    %260 = vst.msk [vmem:[#allocation10] sm:$0xff] %vm259, %v258
    %vm261 = vcmask 203968
    %262 = vst.msk [vmem:[#allocation10] sm:$0xff] %vm261, %v244
    %263 = vrot.lane.b32.xlu0 %v245, 1
    %v264 = vpop.permute.xlu0 %263
    %vm266 = vcmask 212168
    %267 = vst.msk [vmem:[#allocation10] sm:$0xff] %vm266, %v264
    // Predicated region
    $region38: #{tpu_custom_call.1} parent=1 // pred_check
      _
    $region39: #{tpu_custom_call.1} parent=1 // pred_check_branch
      %269 = sbr.rel (0) target = $region41
    $region40: #{tpu_custom_call.1} parent=1 // pred_region
      %s271 = ssub.s32 128, 128
      %272 = vsyncadd [#allocation4], %s271
      %s274 = sshll.u32 [#allocation10], 4
      %s275 = int_to_ptr.vmem [resolvable:$true] %s274
      %277 = dma.vmem_to_hbm [thread:$0]  %s275, 128, %s5, [#allocation4]
    $region41: #{tpu_custom_call.1} parent=1 // pred_fallthru
      _
    // Predicated region
    $region42: #{tpu_custom_call.1} parent=1 // pred_check
      _
    $region43: #{tpu_custom_call.1} parent=1 // pred_check_branch
      %279 = sbr.rel (0) target = $region45
    $region44: #{tpu_custom_call.1} parent=1 // pred_region
      %280 = dma.done [#allocation4], 128
    $region45: #{tpu_custom_call.1} parent=1 // pred_fallthru
      _
    %281 = vsyncpa [#allocation3], 1
    %282 = vsyncpa [#allocation6], 1
    %283 = vsyncpa [#allocation9], 1
    %284 = vsyncpa [#allocation4], 1

</llo_original>
